<compile_context>
chip_gen: v6e
topology: v6e:2x2x1
jax: 0.10.0
libtpu: 0.0.40
codegen_flags: <defaults>
</compile_context>

<pallas_src>
import functools
import math

import jax
import jax.numpy as jnp
from jax.experimental import pallas as pl
from jax.experimental.pallas import tpu as pltpu


def _ceil_to(x, m):
    return ((x + m - 1) // m) * m


def _graphconv_kernel(adj_ref, x_ref, w_ref, b_ref, o_ref, acc_ref, *,
                      tm, tk, deg_col, out_ones_col, apply_sigmoid):
    """One (row-tile, K-tile) step of a GraphConv layer.

    adj_ref : (tm, tk)        bf16 adjacency tile (streamed, double-buffered)
    x_ref   : (n_pad, f_in_p) bf16 features, resident in VMEM (constant index_map)
    w_ref   : (f_in_p, f_out_p) f32 linear weight (resident)
    b_ref   : (1, f_out_p)    f32 bias (resident)
    o_ref   : (tm, f_out_p)   output tile
    acc_ref : (tm, f_in_p)    f32 aggregation accumulator scratch
    """
    i = pl.program_id(0)
    k = pl.program_id(1)

    @pl.when(k == 0)
    def _():
        acc_ref[...] = jnp.zeros_like(acc_ref)

    # Source-node features for this K tile, sliced from the resident bf16 copy.
    xk = x_ref[pl.ds(pl.multiple_of(k * tk, tk), tk), :]          # (tk, f_in_p)

    # Native bf16 x bf16 MXU matmul, accumulated in f32.  The ones lane of x
    # (deg_col) makes acc[:, deg_col] the partial in-degree for free.
    acc_ref[...] += jnp.dot(adj_ref[...], xk,
                            preferred_element_type=jnp.float32)   # (tm, f_in_p)

    @pl.when(k == pl.num_programs(1) - 1)
    def _():
        acc = acc_ref[...]
        # Destination-node features (self connection), sliced from resident x.
        xi = x_ref[pl.ds(pl.multiple_of(i * tm, tm), tm), :].astype(jnp.float32)

        # Degree normalization: in_degree came out of the matmul's ones lane.
        deg = acc[:, deg_col:deg_col + 1]                         # (tm, 1)
        norm = jax.lax.rsqrt(jnp.maximum(deg, 1.0))

        h = (acc + xi) * norm                                     # (tm, f_in_p)

        # Linear layer (small, once per row tile) + bias.  Junk in padded lanes
        # of h is neutralized by the zero-padded rows of W.
        out = jnp.dot(h, w_ref[...], preferred_element_type=jnp.float32)
        out = out + b_ref[...]
        if apply_sigmoid:
            out = jax.nn.sigmoid(out)
        if out_ones_col is not None:
            # Plant the next layer's ones lane so its in-degree is also a free
            # by-product of its aggregation matmul.
            lane = jax.lax.broadcasted_iota(jnp.int32, out.shape, 1)
            out = jnp.where(lane == out_ones_col, jnp.float32(1.0), out)
        o_ref[...] = out.astype(o_ref.dtype)


def _graph_conv_padded(adj_p, x_p, w_p, b_p, *, tm, tk, deg_col, out_ones_col,
                       apply_sigmoid, out_dtype):
    """GraphConv on pre-padded operands. Returns padded (n_pad, f_out_p) output."""
    n_pad = adj_p.shape[0]
    f_in_p = x_p.shape[1]
    f_out_p = w_p.shape[1]
    grid = (n_pad // tm, n_pad // tk)

    out_itemsize = jnp.dtype(out_dtype).itemsize

    # Explicit VMEM budget (adjacency double buffer + resident features + weights
    # + output double buffer + f32 accumulator), capped at v7x's 64 MiB.
    vmem_bytes = (2 * tm * tk * 2                     # adj tiles (bf16, dbuf)
                  + 2 * n_pad * f_in_p * 2            # resident features (bf16)
                  + 2 * (f_in_p * f_out_p + f_out_p) * 4
                  + 2 * tm * f_out_p * out_itemsize   # output tiles (dbuf)
                  + tm * f_in_p * 4)                  # accumulator scratch
    vmem_limit = min(max(2 * vmem_bytes + (4 << 20), 32 << 20), 64 << 20)

    # Honest cost estimate: adjacency + features are each read once from HBM.
    flops = 2 * n_pad * n_pad * f_in_p + 2 * n_pad * f_in_p * f_out_p
    transcendentals = n_pad + (n_pad * f_out_p if apply_sigmoid else 0)
    bytes_accessed = (adj_p.size * adj_p.dtype.itemsize
                      + x_p.size * x_p.dtype.itemsize
                      + w_p.size * 4 + b_p.size * 4
                      + n_pad * f_out_p * out_itemsize)

    kernel = functools.partial(_graphconv_kernel, tm=tm, tk=tk, deg_col=deg_col,
                               out_ones_col=out_ones_col,
                               apply_sigmoid=apply_sigmoid)

    return pl.pallas_call(
        kernel,
        out_shape=jax.ShapeDtypeStruct((n_pad, f_out_p), out_dtype),
        grid_spec=pltpu.PrefetchScalarGridSpec(
            num_scalar_prefetch=0,
            grid=grid,
            in_specs=[
                # Streamed bf16 adjacency tile: the dominant HBM stream.
                pl.BlockSpec((tm, tk), lambda i, k: (i, k)),
                # Features: full-extent, constant index_map -> resident in VMEM
                # (read from HBM exactly once per core).
                pl.BlockSpec((n_pad, f_in_p), lambda i, k: (0, 0)),
                # Weight / bias: resident across the whole grid.
                pl.BlockSpec((f_in_p, f_out_p), lambda i, k: (0, 0)),
                pl.BlockSpec((1, f_out_p), lambda i, k: (0, 0)),
            ],
            out_specs=pl.BlockSpec((tm, f_out_p), lambda i, k: (i, 0)),
            scratch_shapes=[
                pltpu.VMEM((tm, f_in_p), jnp.float32),   # aggregation accumulator
            ],
        ),
        compiler_params=pltpu.CompilerParams(
            dimension_semantics=("parallel", "arbitrary"),
            vmem_limit_bytes=vmem_limit),
        cost_estimate=pl.CostEstimate(
            flops=flops,
            transcendentals=transcendentals,
            bytes_accessed=bytes_accessed),
    )(adj_p, x_p, w_p, b_p)


def gcn_forward(adj, features, w1, b1, w2, b2, *, tm=512, tk=1024):
    """Full GCN forward: conv2(adj, sigmoid(conv1(adj, features)))."""
    n, f_in = features.shape
    hid = w1.shape[1]
    f_out = w2.shape[1]

    # Tiles aligned to the (8, 128) vreg grain, shrunk for small graphs.
    tm = min(tm, _ceil_to(n, 8))
    tk = min(tk, _ceil_to(n, 128))
    n_pad = _ceil_to(n, math.lcm(tm, tk))

    # Feature/hidden widths padded to 128 lanes with one spare "ones" lane whose
    # matmul by-product is the in-degree; output width padded for lane-dense stores.
    f_in_p = _ceil_to(f_in + 1, 128)
    hid_p = _ceil_to(hid + 1, 128)
    f_out_p = _ceil_to(f_out, 128)
    deg_col1 = f_in     # ones lane in the input features
    deg_col2 = hid      # ones lane planted by layer 1 in its output

    # Adjacency entries are exactly {0, 1} -> bf16 is lossless and halves the
    # bytes of the dominant HBM stream.
    adj_p = jnp.zeros((n_pad, n_pad), jnp.bfloat16)
    adj_p = adj_p.at[:n, :n].set(adj.astype(jnp.bfloat16))

    # Features in bf16 (native MXU operand dtype); accumulation stays f32.
    x_p = jnp.zeros((n_pad, f_in_p), jnp.bfloat16)
    x_p = x_p.at[:n, :f_in].set(features.astype(jnp.bfloat16))
    x_p = x_p.at[:, deg_col1].set(jnp.bfloat16(1.0))   # degree lane

    w1_p = jnp.zeros((f_in_p, hid_p), jnp.float32).at[:f_in, :hid].set(w1)
    b1_p = jnp.zeros((1, hid_p), jnp.float32).at[0, :hid].set(b1)
    w2_p = jnp.zeros((hid_p, f_out_p), jnp.float32).at[:hid, :f_out].set(w2)
    b2_p = jnp.zeros((1, f_out_p), jnp.float32).at[0, :f_out].set(b2)

    # Layer 1: fused sigmoid, bf16 output (layer 2's aggregation operand), and
    # plants the ones lane (deg_col2) that layer 2 uses for its free in-degree.
    h = _graph_conv_padded(adj_p, x_p, w1_p, b1_p, tm=tm, tk=tk,
                           deg_col=deg_col1, out_ones_col=deg_col2,
                           apply_sigmoid=True, out_dtype=jnp.bfloat16)
    # Layer 2: final f32 output.
    out = _graph_conv_padded(adj_p, h, w2_p, b2_p, tm=tm, tk=tk,
                             deg_col=deg_col2, out_ones_col=None,
                             apply_sigmoid=False, out_dtype=jnp.float32)
    return out[:n, :f_out]


def reference_gcn(adj, features, w1, b1, w2, b2):
    def conv(x, w, b):
        h = adj @ x
        h = h + x
        deg = jnp.clip(adj.sum(axis=1), 1.0, None)
        h = h * (deg ** -0.5)[:, None]
        return h @ w + b

    h = jax.nn.sigmoid(conv(features, w1, b1))
    return conv(h, w2, b2)


if __name__ == "__main__":
    key = jax.random.PRNGKey(0)
    k_adj, k_x, k_w1, k_b1, k_w2, k_b2 = jax.random.split(key, 6)

    N = 16        # number of graph nodes
    F_IN = 32     # in_feats
    HID = 16      # hid_feats
    F_OUT = 8     # out_feats

    # Deterministic random sparse-ish adjacency (row = dst, col = src).
    adj = (jax.random.uniform(k_adj, (N, N)) < 0.3).astype(jnp.float32)
    features = jax.random.normal(k_x, (N, F_IN), dtype=jnp.float32)

    # nn.Linear-style deterministic init: U(-1/sqrt(fan_in), 1/sqrt(fan_in)).
    def linear_init(kw, kb, fan_in, fan_out):
        bound = 1.0 / (fan_in ** 0.5)
        w = jax.random.uniform(kw, (fan_in, fan_out), minval=-bound,
                               maxval=bound, dtype=jnp.float32)
        b = jax.random.uniform(kb, (fan_out,), minval=-bound,
                               maxval=bound, dtype=jnp.float32)
        return w, b

    w1, b1 = linear_init(k_w1, k_b1, F_IN, HID)
    w2, b2 = linear_init(k_w2, k_b2, HID, F_OUT)

    out = gcn_forward(adj, features, w1, b1, w2, b2)
    out = jax.block_until_ready(out)

    ref = reference_gcn(adj, features, w1, b1, w2, b2)
    assert out.shape == (N, F_OUT)
    # Tolerance accounts for bf16 feature/hidden operands (f32 accumulation).
    assert jnp.allclose(out, ref, atol=2e-2, rtol=2e-2), "mismatch vs reference"

    print("KERNEL_OK")
</pallas_src>

<mosaic_0001>
module attributes {stable_mosaic.version = 11 : i64} {
  func.func @_graphconv_kernel(%arg0: i32, %arg1: i32, %arg2: memref<16x128xbf16, #tpu.memory_space<vmem>>, %arg3: memref<128x128xbf16, #tpu.memory_space<vmem>>, %arg4: memref<128x128xf32, #tpu.memory_space<vmem>>, %arg5: memref<1x128xf32, #tpu.memory_space<vmem>>, %arg6: memref<16x128xbf16, #tpu.memory_space<vmem>>, %arg7: memref<16x128xf32, #tpu.memory_space<vmem>>) attributes {dimension_semantics = [#tpu.dimension_semantics<parallel>, #tpu.dimension_semantics<arbitrary>], iteration_bounds = array<i64: 8, 1>, scalar_prefetch = 0 : i64, scratch_operands = 1 : i64, tpu.core_type = #tpu.core_type<tc>, window_params = [{transform_indices = @transform_0, window_bounds = array<i64: 16, 128>}, {pipeline_mode = #tpu.pipeline_mode<synchronous>, transform_indices = @transform_1, window_bounds = array<i64: 128, 128>}, {pipeline_mode = #tpu.pipeline_mode<synchronous>, transform_indices = @transform_2, window_bounds = array<i64: 128, 128>}, {pipeline_mode = #tpu.pipeline_mode<synchronous>, transform_indices = @transform_3, window_bounds = array<i64: 1, 128>}, {transform_indices = @transform_4, window_bounds = array<i64: 16, 128>}]} {
    %c0_i32 = arith.constant 0 : i32
    %0 = arith.cmpi eq, %arg1, %c0_i32 : i32
    %1 = arith.extui %0 : i1 to i32
    %c0_i32_0 = arith.constant 0 : i32
    %2 = arith.cmpi ne, %1, %c0_i32_0 : i32
    scf.if %2 {
      %cst_9 = arith.constant 0.000000e+00 : f32
      %15 = vector.broadcast %cst_9 : f32 to vector<16x128xf32>
      %c0_10 = arith.constant 0 : index
      %c0_11 = arith.constant 0 : index
      %16 = vector.load %arg7[%c0_10, %c0_11] : memref<16x128xf32, #tpu.memory_space<vmem>>, vector<16x128xf32>
      tpu.vector_store %arg7[%c0_10, %c0_11], %15 {strides = array<i32>} : memref<16x128xf32, #tpu.memory_space<vmem>>, vector<16x128xf32>,
    } else {
    }
    %c128_i32 = arith.constant 128 : i32
    %3 = arith.muli %arg1, %c128_i32 : i32
    %4 = tpu.assume_multiple %3, 128 : i32
    %5 = arith.index_cast %4 : i32 to index
    %c0 = arith.constant 0 : index
    %6 = vector.load %arg3[%5, %c0] : memref<128x128xbf16, #tpu.memory_space<vmem>>, vector<128x128xbf16>
    %c0_1 = arith.constant 0 : index
    %c0_2 = arith.constant 0 : index
    %7 = vector.load %arg7[%c0_1, %c0_2] : memref<16x128xf32, #tpu.memory_space<vmem>>, vector<16x128xf32>
    %c0_3 = arith.constant 0 : index
    %c0_4 = arith.constant 0 : index
    %8 = vector.load %arg2[%c0_3, %c0_4] : memref<16x128xbf16, #tpu.memory_space<vmem>>, vector<16x128xbf16>
    %cst = arith.constant dense<0.000000e+00> : vector<16x128xf32>
    %9 = tpu.matmul %8, %6, %cst {dimension_numbers = #tpu.dot_dimension_numbers<[1], [0], [0], [1], [0, 0, 1, 1], [], []>} : vector<16x128xbf16>, vector<128x128xbf16>, vector<16x128xf32> -> vector<16x128xf32>
    %10 = arith.addf %7, %9 : vector<16x128xf32>
    %c0_5 = arith.constant 0 : index
    %c0_6 = arith.constant 0 : index
    %11 = vector.load %arg7[%c0_5, %c0_6] : memref<16x128xf32, #tpu.memory_space<vmem>>, vector<16x128xf32>
    tpu.vector_store %arg7[%c0_5, %c0_6], %10 {strides = array<i32>} : memref<16x128xf32, #tpu.memory_space<vmem>>, vector<16x128xf32>,
    %c0_i32_7 = arith.constant 0 : i32
    %12 = arith.cmpi eq, %arg1, %c0_i32_7 : i32
    %13 = arith.extui %12 : i1 to i32
    %c0_i32_8 = arith.constant 0 : i32
    %14 = arith.cmpi ne, %13, %c0_i32_8 : i32
    scf.if %14 {
      %c0_9 = arith.constant 0 : index
      %c0_10 = arith.constant 0 : index
      %15 = vector.load %arg7[%c0_9, %c0_10] : memref<16x128xf32, #tpu.memory_space<vmem>>, vector<16x128xf32>
      %c16_i32 = arith.constant 16 : i32
      %16 = arith.muli %arg0, %c16_i32 : i32
      %17 = tpu.assume_multiple %16, 16 : i32
      %18 = arith.index_cast %17 : i32 to index
      %c0_11 = arith.constant 0 : index
      %19 = vector.load %arg3[%18, %c0_11] : memref<128x128xbf16, #tpu.memory_space<vmem>>, vector<16x128xbf16>
      %20 = arith.extf %19 : vector<16x128xbf16> to vector<16x128xf32>
      %21 = vector.extract_strided_slice %15 {offsets = [0, 32], sizes = [16, 1], strides = [1, 1]} : vector<16x128xf32> to vector<16x1xf32>
      %cst_12 = arith.constant 1.000000e+00 : f32
      %22 = vector.broadcast %cst_12 : f32 to vector<16x1xf32>
      %23 = arith.maximumf %21, %22 : vector<16x1xf32>
      %24 = math.rsqrt %23 : vector<16x1xf32>
      %25 = arith.addf %15, %20 : vector<16x128xf32>
      %26 = vector.broadcast %24 : vector<16x1xf32> to vector<16x128xf32>
      %27 = arith.mulf %25, %26 : vector<16x128xf32>
      %c0_13 = arith.constant 0 : index
      %c0_14 = arith.constant 0 : index
      %28 = vector.load %arg4[%c0_13, %c0_14] : memref<128x128xf32, #tpu.memory_space<vmem>>, vector<128x128xf32>
      %cst_15 = arith.constant dense<0.000000e+00> : vector<16x128xf32>
      %29 = tpu.matmul %27, %28, %cst_15 {dimension_numbers = #tpu.dot_dimension_numbers<[1], [0], [0], [1], [0, 0, 1, 1], [], []>} : vector<16x128xf32>, vector<128x128xf32>, vector<16x128xf32> -> vector<16x128xf32>
      %c0_16 = arith.constant 0 : index
      %c0_17 = arith.constant 0 : index
      %30 = vector.load %arg5[%c0_16, %c0_17] : memref<1x128xf32, #tpu.memory_space<vmem>>, vector<1x128xf32>
      %31 = vector.broadcast %30 : vector<1x128xf32> to vector<16x128xf32>
      %32 = arith.addf %29, %31 : vector<16x128xf32>
      %33 = arith.negf %32 : vector<16x128xf32>
      %34 = math.exp %33 : vector<16x128xf32>
      %cst_18 = arith.constant 1.000000e+00 : f32
      %35 = vector.broadcast %cst_18 : f32 to vector<16x128xf32>
      %36 = arith.addf %35, %34 : vector<16x128xf32>
      %37 = arith.divf %35, %36 : vector<16x128xf32>
      %38 = tpu.iota {dimensions = array<i32: 1>} : vector<16x128xi32>
      %c16_i32_19 = arith.constant 16 : i32
      %39 = vector.broadcast %c16_i32_19 : i32 to vector<16x128xi32>
      %40 = arith.cmpi eq, %38, %39 : vector<16x128xi32>
      %cst_20 = arith.constant 1.000000e+00 : f32
      %41 = vector.broadcast %cst_20 : f32 to vector<16x128xf32>
      %42 = arith.select %40, %41, %37 : vector<16x128xi1>, vector<16x128xf32>
      %43 = arith.truncf %42 : vector<16x128xf32> to vector<16x128xbf16>
      %c0_21 = arith.constant 0 : index
      %c0_22 = arith.constant 0 : index
      %44 = vector.load %arg6[%c0_21, %c0_22] : memref<16x128xbf16, #tpu.memory_space<vmem>>, vector<16x128xbf16>
      tpu.vector_store %arg6[%c0_21, %c0_22], %43 {strides = array<i32>} : memref<16x128xbf16, #tpu.memory_space<vmem>>, vector<16x128xbf16>,
    } else {
    }
    return
  }
  func.func @transform_0(%arg0: i32, %arg1: i32) -> (i32, i32) {
    %c0_i32 = arith.constant 0 : i32
    return %arg0, %arg1 : i32, i32
  }
  func.func @transform_1(%arg0: i32, %arg1: i32) -> (i32, i32) {
    %c0_i32 = arith.constant 0 : i32
    %c0_i32_0 = arith.constant 0 : i32
    %c0_i32_1 = arith.constant 0 : i32
    return %c0_i32, %c0_i32_0 : i32, i32
  }
  func.func @transform_2(%arg0: i32, %arg1: i32) -> (i32, i32) {
    %c0_i32 = arith.constant 0 : i32
    %c0_i32_0 = arith.constant 0 : i32
    %c0_i32_1 = arith.constant 0 : i32
    return %c0_i32, %c0_i32_0 : i32, i32
  }
  func.func @transform_3(%arg0: i32, %arg1: i32) -> (i32, i32) {
    %c0_i32 = arith.constant 0 : i32
    %c0_i32_0 = arith.constant 0 : i32
    %c0_i32_1 = arith.constant 0 : i32
    return %c0_i32, %c0_i32_0 : i32, i32
  }
  func.func @transform_4(%arg0: i32, %arg1: i32) -> (i32, i32) {
    %c0_i32 = arith.constant 0 : i32
    %c0_i32_0 = arith.constant 0 : i32
    return %arg0, %c0_i32 : i32, i32
  }
}

</mosaic_0001>

<llo_original>
// kernel: tpu_custom_call.1
$region0: #{tpu_custom_call.1}
  #allocation0 [shape = 'u32[]', space=smem, size = 0x4, offset = 0x4, fixed_abs, tag = 'smem constant byte address 0x4 - core index']
  #allocation1 [shape = 'u32[144,128]{1,0:T(1,128)}', space=vmem, size = 0x12000, scoped, tag = 'internal scratch']
  #allocation2 [shape = 'f32[16,128]{1,0:T(8,128)}', space=vmem, size = 0x2000, scoped, tag = 'scratch operand']
  %s0 = inlined_call_operand.hbm [shape: bf16[128,128], index: 0, kind: input, shape index: {}]
  %s1 = inlined_call_operand.hbm [shape: bf16[128,128], index: 1, kind: input, shape index: {}]
  %s2 = inlined_call_operand.hbm [shape: f32[128,128], index: 2, kind: input, shape index: {}]
  %s3 = inlined_call_operand.vmem [shape: f32[1,128], index: 3, kind: input, shape index: {}]
  %s4 = inlined_call_operand.hbm [shape: bf16[128,128], index: 4, kind: output, shape index: {}]
  %s5 = sld [smem:[#allocation0]]
  $region69: #{tpu_custom_call.1} parent=0
    _
  %s7 = ssub.s32 1, %s5
  %s8 = scalar_select 0, %s7, %s5
  $region1: #{tpu_custom_call.1} parent=0
    #allocation3 [shape = 'u8[8192]{0}', space=vmem, size = 0x2000, scoped, tag = 'input window, operand 0']
    #allocation4 [shape = 's32[2]{0}', space=sflag, size = 0x8, scoped, tag = 'scoped memory for tpu_custom_call.1']
    #allocation5 [shape = 's32[2]{0}', space=sflag, size = 0x8, scoped, tag = 'scoped memory for tpu_custom_call.1']
    #allocation6 [shape = 'u8[32768]{0}', space=vmem, size = 0x8000, scoped, tag = 'input window, operand 1, single buffered']
    #allocation7 [shape = 's32[1]{0}', space=sflag, size = 0x4, scoped, tag = 'scoped memory for tpu_custom_call.1']
    #allocation8 [shape = 'u8[65536]{0}', space=vmem, size = 0x10000, scoped, tag = 'input window, operand 2, single buffered']
    #allocation9 [shape = 'u8[8192]{0}', space=vmem, size = 0x2000, scoped, tag = 'output window, operand 0']
    %9 = vsyncpa [#allocation4], 0
    %s10 = scalar_lea.sflag [#allocation4], 1
    %11 = vsyncpa %s10, 0
    %12 = vsyncpa [#allocation7], 0
    %13 = vsyncpa [#allocation5], 0
    %s14 = scalar_lea.sflag [#allocation5], 1
    %15 = vsyncpa %s14, 0
    loop: start=0, step=1, limit=10
    $region2: #{tpu_custom_call.1} parent=1 // loop_pre_header
      _
    $region3: #{tpu_custom_call.1} parent=1 // loop_header
      %s17 = sphi 0, %s21
      %p18 = scmp.ge.s32.totalorder %s17, 10
      %s24 = sphi 0, %s36
      %s25 = sphi 0, %s32
      %s26 = sphi 0, %s24
      %s27 = sphi 0, %s25
      %s28 = sphi 0, %s26
      %s29 = sphi 0, %s27
      %s41 = sphi 0, %s43
      %s44 = sphi 0, %s41
      %s45 = sphi 0, %s44
      %s61 = sphi 0, %s45
      %s65 = sphi 0, %s65
      %s67 = sphi 0, %s65
      %s68 = sphi 0, %s67
      %s82 = sphi 0, %s68
      %s86 = sphi 0, %s86
      %s88 = sphi 0, %s86
      %s89 = sphi 0, %s88
      %s103 = sphi 0, %s89
      %s107 = sphi 0, %s107
      %s109 = sphi 0, %s107
      %s110 = sphi 0, %s109
      %s124 = sphi 0, %s110
      %s130 = sphi 0, %s132
      %s133 = sphi 0, %s130
      %s134 = sphi 0, %s133
      %s150 = sphi 0, %s134
    $region4: #{tpu_custom_call.1} parent=1 // loop_header_branch
      %20 = sbr.rel (%p18) target = $region8
    $region5: #{tpu_custom_call.1} parent=1 // loop_body
      %s22 = ssub.s32 %s17, 1
      %s23 = ssub.s32 %s17, 2
      %s30 = sadd.s32 1, %s25
      %p31 = scmp.ge.s32.totalorder %s30, 1
      %s32 = scalar_select %p31, 0, %s30
      %s33 = sadd.s32 1, %s24
      %s34 = scalar_select %p31, %s33, %s24
      %p35 = scmp.ge.s32.totalorder %s34, 8
      %s36 = scalar_select %p35, 0, %s34
      %s37 = ssub.s32 %s24, %s36
      %s38 = ssub.s32 %s25, %s32
      %s39 = sor.u32 %s37, %s38
      %p40 = scmp.eq.s32.totalorder %s39, 0
      %s42 = sadd.s32 %s41, 1
      %s43 = scalar_select %p40, %s41, %s42
      %p46 = pneg %p40
      %p47 = scmp.eq.s32.totalorder %s17, 7
      %p48 = por %p46, %p47
      %p49 = scmp.ne.s32.totalorder %s41, %s44
      %p50 = scmp.eq.s32.totalorder %s17, 0
      %p51 = por %p49, %p50
      %p52 = scmp.ne.s32.totalorder %s41, %s44
      %p53 = scmp.eq.s32.totalorder %s22, 7
      %p54 = por %p52, %p53
      %p55 = scmp.ne.s32.totalorder %s44, %s45
      %p56 = scmp.eq.s32.totalorder %s22, 0
      %p57 = por %p55, %p56
      %p58 = scmp.ne.s32.totalorder %s44, %s45
      %p59 = scmp.eq.s32.totalorder %s23, 7
      %p60 = por %p58, %p59
      %p62 = scmp.ne.s32.totalorder %s45, %s61
      %p63 = scmp.eq.s32.totalorder %s23, 0
      %p64 = por %p62, %p63
      %s66 = sadd.s32 %s65, 1
      %p69 = scmp.eq.s32.totalorder %s17, 7
      %p70 = scmp.ne.s32.totalorder %s65, %s67
      %p71 = scmp.eq.s32.totalorder %s17, 0
      %p72 = por %p70, %p71
      %p73 = scmp.ne.s32.totalorder %s65, %s67
      %p74 = scmp.eq.s32.totalorder %s22, 7
      %p75 = por %p73, %p74
      %p76 = scmp.ne.s32.totalorder %s67, %s68
      %p77 = scmp.eq.s32.totalorder %s22, 0
      %p78 = por %p76, %p77
      %p79 = scmp.ne.s32.totalorder %s67, %s68
      %p80 = scmp.eq.s32.totalorder %s23, 7
      %p81 = por %p79, %p80
      %p83 = scmp.ne.s32.totalorder %s68, %s82
      %p84 = scmp.eq.s32.totalorder %s23, 0
      %p85 = por %p83, %p84
      %s87 = sadd.s32 %s86, 1
      %p90 = scmp.eq.s32.totalorder %s17, 7
      %p91 = scmp.ne.s32.totalorder %s86, %s88
      %p92 = scmp.eq.s32.totalorder %s17, 0
      %p93 = por %p91, %p92
      %p94 = scmp.ne.s32.totalorder %s86, %s88
      %p95 = scmp.eq.s32.totalorder %s22, 7
      %p96 = por %p94, %p95
      %p97 = scmp.ne.s32.totalorder %s88, %s89
      %p98 = scmp.eq.s32.totalorder %s22, 0
      %p99 = por %p97, %p98
      %p100 = scmp.ne.s32.totalorder %s88, %s89
      %p101 = scmp.eq.s32.totalorder %s23, 7
      %p102 = por %p100, %p101
      %p104 = scmp.ne.s32.totalorder %s89, %s103
      %p105 = scmp.eq.s32.totalorder %s23, 0
      %p106 = por %p104, %p105
      %s108 = sadd.s32 %s107, 1
      %p111 = scmp.eq.s32.totalorder %s17, 7
      %p112 = scmp.ne.s32.totalorder %s107, %s109
      %p113 = scmp.eq.s32.totalorder %s17, 0
      %p114 = por %p112, %p113
      %p115 = scmp.ne.s32.totalorder %s107, %s109
      %p116 = scmp.eq.s32.totalorder %s22, 7
      %p117 = por %p115, %p116
      %p118 = scmp.ne.s32.totalorder %s109, %s110
      %p119 = scmp.eq.s32.totalorder %s22, 0
      %p120 = por %p118, %p119
      %p121 = scmp.ne.s32.totalorder %s109, %s110
      %p122 = scmp.eq.s32.totalorder %s23, 7
      %p123 = por %p121, %p122
      %p125 = scmp.ne.s32.totalorder %s110, %s124
      %p126 = scmp.eq.s32.totalorder %s23, 0
      %p127 = por %p125, %p126
      %s128 = ssub.s32 %s24, %s36
      %p129 = scmp.eq.s32.totalorder %s128, 0
      %s131 = sadd.s32 %s130, 1
      %s132 = scalar_select %p129, %s130, %s131
      %p135 = pneg %p129
      %p136 = scmp.eq.s32.totalorder %s17, 7
      %p137 = por %p135, %p136
      %p138 = scmp.ne.s32.totalorder %s130, %s133
      %p139 = scmp.eq.s32.totalorder %s17, 0
      %p140 = por %p138, %p139
      %p141 = scmp.ne.s32.totalorder %s130, %s133
      %p142 = scmp.eq.s32.totalorder %s22, 7
      %p143 = por %p141, %p142
      %p144 = scmp.ne.s32.totalorder %s133, %s134
      %p145 = scmp.eq.s32.totalorder %s22, 0
      %p146 = por %p144, %p145
      %p147 = scmp.ne.s32.totalorder %s133, %s134
      %p148 = scmp.eq.s32.totalorder %s23, 7
      %p149 = por %p147, %p148
      %p151 = scmp.ne.s32.totalorder %s134, %s150
      %p152 = scmp.eq.s32.totalorder %s23, 0
      %p153 = por %p151, %p152
      %p154 = scmp.le.s32.totalorder 1, %s17
      %p155 = scmp.lt.s32.totalorder %s17, 9
      %p156 = pnand %p154, %p155
      %p157 = pneg %p156
      // Predicated region
      $region9: #{tpu_custom_call.1} parent=5 // pred_check
        _
      $region10: #{tpu_custom_call.1} parent=5 // pred_check_branch
        %159 = sbr.rel (%p156) target = $region12
      $region11: #{tpu_custom_call.1} parent=5 // pred_region
        %s160 = ssub.s32 %s17, 1
        // Predicated region
        $region13: #{tpu_custom_call.1} parent=11 // pred_check
          %p161 = pneg %p78
        $region14: #{tpu_custom_call.1} parent=11 // pred_check_branch
          %163 = sbr.rel (%p161) target = $region16
        $region15: #{tpu_custom_call.1} parent=11 // pred_region
          %s165 = ssub.s32 1024, 1024
          %166 = vsyncadd [#allocation7], %s165
          %s167 = sshll.u32 [#allocation6], 4
          %s168 = int_to_ptr.vmem [resolvable:$true] %s167
          %173 = dma.hbm_to_vmem [thread:$0]  %s1, 1024, %s168, [#allocation7], 64, 64, 4
        $region16: #{tpu_custom_call.1} parent=11 // pred_fallthru
          _
        // Predicated region
        $region17: #{tpu_custom_call.1} parent=11 // pred_check
          %p174 = pneg %p99
        $region18: #{tpu_custom_call.1} parent=11 // pred_check_branch
          %176 = sbr.rel (%p174) target = $region20
        $region19: #{tpu_custom_call.1} parent=11 // pred_region
          %s178 = ssub.s32 2048, 2048
          %179 = vsyncadd [#allocation7], %s178
          %s180 = sshll.u32 [#allocation8], 4
          %s181 = int_to_ptr.vmem [resolvable:$true] %s180
          %186 = dma.hbm_to_vmem [thread:$0]  %s2, 2048, %s181, [#allocation7], 128, 128, 8
        $region20: #{tpu_custom_call.1} parent=11 // pred_fallthru
          _
        // Predicated region
        $region21: #{tpu_custom_call.1} parent=11 // pred_check
          %p187 = pneg %p120
        $region22: #{tpu_custom_call.1} parent=11 // pred_check_branch
          %189 = sbr.rel (%p187) target = $region24
        $region23: #{tpu_custom_call.1} parent=11 // pred_region
          _
        $region24: #{tpu_custom_call.1} parent=11 // pred_fallthru
          _
      $region12: #{tpu_custom_call.1} parent=5 // pred_fallthru
        _
      %p190 = scmp.lt.s32.totalorder %s17, 8
      // Predicated region
      $region25: #{tpu_custom_call.1} parent=5 // pred_check
        %p191 = pneg %p190
      $region26: #{tpu_custom_call.1} parent=5 // pred_check_branch
        %193 = sbr.rel (%p191) target = $region28
      $region27: #{tpu_custom_call.1} parent=5 // pred_region
        // Predicated region
        $region29: #{tpu_custom_call.1} parent=27 // pred_check
          %p194 = pneg %p51
        $region30: #{tpu_custom_call.1} parent=27 // pred_check_branch
          %196 = sbr.rel (%p194) target = $region32
        $region31: #{tpu_custom_call.1} parent=27 // pred_region
          %s197 = sand.u32 %s41, 1
          %s198 = scalar_lea.sflag [#allocation4], %s197
          %s199 = sand.u32 %s41, 1
          %s200 = smul.addr %s199, 8
          %s201 = scalar_lea.vmem [#allocation3], %s200
          %s202 = smul.u32 2, %s24
          %s204 = ssub.s32 128, 128
          %205 = vsyncadd %s198, %s204
          %s206 = sadd.s32 %s25, %s202
          %s207 = smul.addr %s206, 64
          %s208 = scalar_lea.hbm %s0, %s207
          %s209 = sshll.u32 %s201, 4
          %s210 = int_to_ptr.vmem [resolvable:$true] %s209
          %215 = dma.hbm_to_vmem [thread:$0]  %s208, 128, %s210, %s198, 64, 64, 4
        $region32: #{tpu_custom_call.1} parent=27 // pred_fallthru
          _
      $region28: #{tpu_custom_call.1} parent=5 // pred_fallthru
        _
      %p216 = scmp.le.s32.totalorder 1, %s17
      %p217 = scmp.lt.s32.totalorder %s17, 9
      %p218 = pnand %p216, %p217
      %p219 = pneg %p218
      // Predicated region
      $region33: #{tpu_custom_call.1} parent=5 // pred_check
        _
      $region34: #{tpu_custom_call.1} parent=5 // pred_check_branch
        %221 = sbr.rel (%p218) target = $region36
      $region35: #{tpu_custom_call.1} parent=5 // pred_region
        %s222 = ssub.s32 %s17, 1
        %s223 = sand.u32 %s44, 1
        %s224 = scalar_lea.sflag [#allocation4], %s223
        %s225 = sand.u32 %s44, 1
        %s226 = smul.addr %s225, 8
        %s227 = scalar_lea.vmem [#allocation3], %s226
        // Predicated region
        $region37: #{tpu_custom_call.1} parent=35 // pred_check
          %p228 = pneg %p57
        $region38: #{tpu_custom_call.1} parent=35 // pred_check_branch
          %230 = sbr.rel (%p228) target = $region40
        $region39: #{tpu_custom_call.1} parent=35 // pred_region
          %231 = dma.done %s224, 128
        $region40: #{tpu_custom_call.1} parent=35 // pred_fallthru
          _
        // Predicated region
        $region41: #{tpu_custom_call.1} parent=35 // pred_check
          %p232 = pneg %p78
        $region42: #{tpu_custom_call.1} parent=35 // pred_check_branch
          %234 = sbr.rel (%p232) target = $region44
        $region43: #{tpu_custom_call.1} parent=35 // pred_region
          %235 = dma.done [#allocation7], 1024
        $region44: #{tpu_custom_call.1} parent=35 // pred_fallthru
          _
        // Predicated region
        $region45: #{tpu_custom_call.1} parent=35 // pred_check
          %p236 = pneg %p99
        $region46: #{tpu_custom_call.1} parent=35 // pred_check_branch
          %238 = sbr.rel (%p236) target = $region48
        $region47: #{tpu_custom_call.1} parent=35 // pred_region
          %239 = dma.done [#allocation7], 2048
        $region48: #{tpu_custom_call.1} parent=35 // pred_fallthru
          _
        %s240 = sand.u32 %s44, 1
        %s241 = scalar_lea.sflag [#allocation4], %s240
        %s242 = sand.u32 %s44, 1
        %s243 = smul.addr %s242, 8
        %s244 = scalar_lea.vmem [#allocation3], %s243
        %p245 = pneg %p57
        %p246 = pneg %p54
        %p247 = pneg %p78
        %p248 = pneg %p75
        %p249 = pneg %p99
        %p250 = pneg %p96
        %p251 = pneg %p120
        %p252 = pneg %p117
        %p253 = pneg %p146
        %p254 = pneg %p143
        %s255 = sand.u32 %s133, 1
        %s256 = scalar_lea.sflag [#allocation5], %s255
        %s257 = sand.u32 %s133, 1
        %s258 = smul.addr %s257, 8
        %s259 = scalar_lea.vmem [#allocation9], %s258
        %s260 = smul.u32 2, %s26
        %s261 = smul.u32 2, %s26
        %p263 = scmp.eq.s32.totalorder %s27, 0
        // Predicated region
        $region49: #{tpu_custom_call.1} parent=35 // pred_check
          %p264 = pneg %p263
        $region50: #{tpu_custom_call.1} parent=35 // pred_check_branch
          %266 = sbr.rel (%p264) target = $region52
        $region51: #{tpu_custom_call.1} parent=35 // pred_region
          %267 = vst [vmem:[#allocation2] sm:$0xff] 0.0
          %268 = vst [vmem:[#allocation2 + $0x8] sm:$0xff] 0.0
        $region52: #{tpu_custom_call.1} parent=35 // pred_fallthru
          _
        %s269 = smul.u32 %s27, 128
        %s270 = sshra.s32 %s269, 3
        %s271 = sand.u32 %s269, 7
        %s272 = smul.addr %s270, 4
        %s273 = scalar_lea.vmem [#allocation6], %s272
        %v274 = vld [vmem:[%s273] sm:$0xf]
        %v275 = vld [vmem:[%s273 + $0x4] sm:$0xf]
        %v276 = vld [vmem:[%s273 + $0x8] sm:$0xf]
        %v277 = vld [vmem:[%s273 + $0xc] sm:$0xf]
        %v278 = vld [vmem:[%s273 + $0x10] sm:$0xf]
        %v279 = vld [vmem:[%s273 + $0x14] sm:$0xf]
        %v280 = vld [vmem:[%s273 + $0x18] sm:$0xf]
        %v281 = vld [vmem:[%s273 + $0x1c] sm:$0xf]
        %v282 = vld [vmem:[%s273 + $0x20] sm:$0xf]
        %v283 = vld [vmem:[%s273 + $0x24] sm:$0xf]
        %v284 = vld [vmem:[%s273 + $0x28] sm:$0xf]
        %v285 = vld [vmem:[%s273 + $0x2c] sm:$0xf]
        %v286 = vld [vmem:[%s273 + $0x30] sm:$0xf]
        %v287 = vld [vmem:[%s273 + $0x34] sm:$0xf]
        %v288 = vld [vmem:[%s273 + $0x38] sm:$0xf]
        %v289 = vld [vmem:[%s273 + $0x3c] sm:$0xf]
        %v290 = vld [vmem:[#allocation2] sm:$0xff]
        %v291 = vld [vmem:[#allocation2 + $0x8] sm:$0xff]
        %v292 = vld [vmem:[%s227] sm:$0xf]
        %v293 = vld [vmem:[%s227 + $0x4] sm:$0xf]
        %v296 = vunpack.c.l.b16 %v292
        %v297 = vunpack.c.l.b16 %v293
        %v298 = vpack.c.b16 %v297, %v296
        %v316 = vunpack.c.l.b16 %v274
        %v317 = vunpack.c.l.b16 %v275
        %v318 = vunpack.c.l.b16 %v276
        %v319 = vunpack.c.l.b16 %v277
        %v320 = vunpack.c.l.b16 %v278
        %v321 = vunpack.c.l.b16 %v279
        %v322 = vunpack.c.l.b16 %v280
        %v323 = vunpack.c.l.b16 %v281
        %v324 = vunpack.c.l.b16 %v282
        %v325 = vunpack.c.l.b16 %v283
        %v326 = vunpack.c.l.b16 %v284
        %v327 = vunpack.c.l.b16 %v285
        %v328 = vunpack.c.l.b16 %v286
        %v329 = vunpack.c.l.b16 %v287
        %v330 = vunpack.c.l.b16 %v288
        %v331 = vunpack.c.l.b16 %v289
        %v332 = vpack.c.b16 %v317, %v316
        %v333 = vpack.c.b16 %v319, %v318
        %v334 = vpack.c.b16 %v321, %v320
        %v335 = vpack.c.b16 %v323, %v322
        %v336 = vpack.c.b16 %v325, %v324
        %v337 = vpack.c.b16 %v327, %v326
        %v338 = vpack.c.b16 %v329, %v328
        %v339 = vpack.c.b16 %v331, %v330
        %348 = vmatprep.subr.bf16.mxu0 0
        %349 = vmatpush1.bf16.msra.mxu0 %v339
        %350 = vmatprep.subr.bf16.mxu0 0
        %351 = vmatpush1.bf16.msra.mxu0 %v338
        %352 = vmatprep.subr.bf16.mxu0 0
        %353 = vmatpush1.bf16.msra.mxu0 %v337
        %354 = vmatprep.subr.bf16.mxu0 0
        %355 = vmatpush1.bf16.msra.mxu0 %v336
        %356 = vmatprep.subr.bf16.mxu0 0
        %357 = vmatpush1.bf16.msra.mxu0 %v335
        %358 = vmatprep.subr.bf16.mxu0 0
        %359 = vmatpush1.bf16.msra.mxu0 %v334
        %360 = vmatprep.subr.bf16.mxu0 0
        %361 = vmatpush1.bf16.msra.mxu0 %v333
        %362 = vmatprep.subr.bf16.mxu0 0
        %363 = vmatpush1.bf16.msra.mxu0 %v332
        %364 = vmatprep.subr.bf16.mxu0 0
        %365 = vmatpush2.bf16.msra.mxu0 0
        %366 = vmatprep.subr.bf16.mxu0 0
        %367 = vmatpush2.bf16.msra.mxu0 0
        %368 = vmatprep.subr.bf16.mxu0 0
        %369 = vmatpush2.bf16.msra.mxu0 0
        %370 = vmatprep.subr.bf16.mxu0 0
        %371 = vmatpush2.bf16.msra.mxu0 0
        %372 = vmatprep.subr.bf16.mxu0 0
        %373 = vmatpush2.bf16.msra.mxu0 0
        %374 = vmatprep.subr.bf16.mxu0 0
        %375 = vmatpush2.bf16.msra.mxu0 0
        %376 = vmatprep.subr.bf16.mxu0 0
        %377 = vmatpush2.bf16.msra.mxu0 0
        %378 = vmatprep.subr.bf16.mxu0 0
        %379 = vmatpush2.bf16.msra.mxu0 0
        %380 = vmatprep.mubr.bf16.mxu0 0
        %381 = vmatmul.mubr.bf16.gmra.mxu0 %v298
        %v382 = vpop.f32.mrf.mxu0
        %v383 = vadd.f32 0.0, %v382
        %v384 = vpop.f32.mrf.mxu0
        %v385 = vpop.f32.mrf.mxu0
        %v386 = vadd.f32 0.0, %v385
        %v387 = vpop.f32.mrf.mxu0
        %388 = vdwg.mxu0
        %v389 = vadd.f32 %v290, %v383
        %v390 = vadd.f32 %v291, %v386
        %391 = vst [vmem:[#allocation2] sm:$0xff] %v389
        %392 = vst [vmem:[#allocation2 + $0x8] sm:$0xff] %v390
        // Predicated region
        $region53: #{tpu_custom_call.1} parent=35 // pred_check
          %p393 = pneg %p263
        $region54: #{tpu_custom_call.1} parent=35 // pred_check_branch
          %395 = sbr.rel (%p393) target = $region56
        $region55: #{tpu_custom_call.1} parent=35 // pred_region
          %v396 = vld [vmem:[#allocation2] sm:$0xff]
          %v397 = vld [vmem:[#allocation2 + $0x8] sm:$0xff]
          %s398 = smul.u32 %s26, 16
          %s399 = sshra.s32 %s398, 3
          %s400 = sand.u32 %s398, 7
          %s401 = smul.addr %s399, 4
          %s402 = scalar_lea.vmem [#allocation6], %s401
          %v403 = vld [vmem:[%s402] sm:$0xf]
          %v404 = vld [vmem:[%s402 + $0x4] sm:$0xf]
          %v405 = vunpack.c.l.bf16 %v403
          %v406 = vunpack.c.l.bf16 %v404
          %v407 = vmax.f32 %v396, 1.0
          %v408 = vmax.f32 %v397, 1.0
          %v409 = vrsqrt.pop %v407
          %v410 = vrsqrt.pop %v408
          %v411 = vadd.f32 %v396, %v405
          %v412 = vadd.f32 %v397, %v406
          %414 = vset.pattern.permute.xlu0 32
          %415 = vperm.xlu0 %414, %v409
          %v416 = vpop.permute.xlu0 %415
          %419 = vset.pattern.permute.xlu0 32
          %420 = vperm.xlu0 %419, %v410
          %v421 = vpop.permute.xlu0 %420
          %v423 = vmul.f32 %v411, %v416
          %v424 = vmul.f32 %v412, %v421
          %v425 = vld [vmem:[#allocation8] sm:$0xff]
          %v426 = vld [vmem:[#allocation8 + $0x8] sm:$0xff]
          %v427 = vld [vmem:[#allocation8 + $0x10] sm:$0xff]
          %v428 = vld [vmem:[#allocation8 + $0x18] sm:$0xff]
          %v429 = vld [vmem:[#allocation8 + $0x20] sm:$0xff]
          %v430 = vld [vmem:[#allocation8 + $0x28] sm:$0xff]
          %v431 = vld [vmem:[#allocation8 + $0x30] sm:$0xff]
          %v432 = vld [vmem:[#allocation8 + $0x38] sm:$0xff]
          %v433 = vld [vmem:[#allocation8 + $0x40] sm:$0xff]
          %v434 = vld [vmem:[#allocation8 + $0x48] sm:$0xff]
          %v435 = vld [vmem:[#allocation8 + $0x50] sm:$0xff]
          %v436 = vld [vmem:[#allocation8 + $0x58] sm:$0xff]
          %v437 = vld [vmem:[#allocation8 + $0x60] sm:$0xff]
          %v438 = vld [vmem:[#allocation8 + $0x68] sm:$0xff]
          %v439 = vld [vmem:[#allocation8 + $0x70] sm:$0xff]
          %v440 = vld [vmem:[#allocation8 + $0x78] sm:$0xff]
          %v441 = vld [vmem:[%s3] sm:$0x1]
          %v443 = vlaneseq
          %v444 = vshrl.u32 %v443, 7
          %v445 = vsub.s32 0, %v444
          %v446 = vrot.slane %v441, %v445
          %448 = vmatprep.subr.mxu0 0.0
          %449 = vmatpush1.msra.mxu0 %v440
          %450 = vmatprep.subr.mxu0 0.0
          %451 = vmatpush1.msra.mxu0 %v439
          %452 = vmatprep.subr.mxu0 0.0
          %453 = vmatpush1.msra.mxu0 %v438
          %454 = vmatprep.subr.mxu0 0.0
          %455 = vmatpush1.msra.mxu0 %v437
          %456 = vmatprep.subr.mxu0 0.0
          %457 = vmatpush1.msra.mxu0 %v436
          %458 = vmatprep.subr.mxu0 0.0
          %459 = vmatpush1.msra.mxu0 %v435
          %460 = vmatprep.subr.mxu0 0.0
          %461 = vmatpush1.msra.mxu0 %v434
          %462 = vmatprep.subr.mxu0 0.0
          %463 = vmatpush1.msra.mxu0 %v433
          %464 = vmatprep.subr.mxu0 0.0
          %465 = vmatpush1.msra.mxu0 %v432
          %466 = vmatprep.subr.mxu0 0.0
          %467 = vmatpush1.msra.mxu0 %v431
          %468 = vmatprep.subr.mxu0 0.0
          %469 = vmatpush1.msra.mxu0 %v430
          %470 = vmatprep.subr.mxu0 0.0
          %471 = vmatpush1.msra.mxu0 %v429
          %472 = vmatprep.subr.mxu0 0.0
          %473 = vmatpush1.msra.mxu0 %v428
          %474 = vmatprep.subr.mxu0 0.0
          %475 = vmatpush1.msra.mxu0 %v427
          %476 = vmatprep.subr.mxu0 0.0
          %477 = vmatpush1.msra.mxu0 %v426
          %478 = vmatprep.subr.mxu0 0.0
          %479 = vmatpush1.msra.mxu0 %v425
          %480 = vmatprep.subr.mxu0 0.0
          %481 = vmatpush2.msra.mxu0 0.0
          %482 = vmatprep.subr.mxu0 0.0
          %483 = vmatpush2.msra.mxu0 0.0
          %484 = vmatprep.subr.mxu0 0.0
          %485 = vmatpush2.msra.mxu0 0.0
          %486 = vmatprep.subr.mxu0 0.0
          %487 = vmatpush2.msra.mxu0 0.0
          %488 = vmatprep.subr.mxu0 0.0
          %489 = vmatpush2.msra.mxu0 0.0
          %490 = vmatprep.subr.mxu0 0.0
          %491 = vmatpush2.msra.mxu0 0.0
          %492 = vmatprep.subr.mxu0 0.0
          %493 = vmatpush2.msra.mxu0 0.0
          %494 = vmatprep.subr.mxu0 0.0
          %495 = vmatpush2.msra.mxu0 0.0
          %496 = vmatprep.subr.mxu0 0.0
          %497 = vmatpush2.msra.mxu0 0.0
          %498 = vmatprep.subr.mxu0 0.0
          %499 = vmatpush2.msra.mxu0 0.0
          %500 = vmatprep.subr.mxu0 0.0
          %501 = vmatpush2.msra.mxu0 0.0
          %502 = vmatprep.subr.mxu0 0.0
          %503 = vmatpush2.msra.mxu0 0.0
          %504 = vmatprep.subr.mxu0 0.0
          %505 = vmatpush2.msra.mxu0 0.0
          %506 = vmatprep.subr.mxu0 0.0
          %507 = vmatpush2.msra.mxu0 0.0
          %508 = vmatprep.subr.mxu0 0.0
          %509 = vmatpush2.msra.mxu0 0.0
          %510 = vmatprep.subr.mxu0 0.0
          %511 = vmatpush2.msra.mxu0 0.0
          %512 = vmatprep.mubr.f32.mxu0 0.0
          %513 = vmatmul.mubr.f32.gmra.mxu0 %v423
          %v514 = vpop.f32.mrf.mxu0
          %v515 = vadd.f32 %v446, %v514
          %v516 = vpop.f32.mrf.mxu0
          %517 = vmatprep.mubr.f32.mxu0 0.0
          %518 = vmatmul.mubr.f32.gmra.mxu0 %v424
          %v519 = vpop.f32.mrf.mxu0
          %v520 = vadd.f32 %v446, %v519
          %v521 = vpop.f32.mrf.mxu0
          %522 = vdwg.mxu0
          %v523 = vxor.u32 %v515, 2147483648
          %v524 = vxor.u32 %v520, 2147483648
          %v525 = vmul.f32 %v523, 1.442695
          %v526 = vpow.pop %v525
          %v527 = vmul.f32 %v524, 1.442695
          %v528 = vpow.pop %v527
          %v529 = vadd.f32 %v526, 1.0
          %v530 = vadd.f32 %v528, 1.0
          %v531 = vrcp.pop %v529
          %v532 = vmul.f32 1.0, %v531
          %v533 = vrcp.pop %v530
          %v534 = vmul.f32 1.0, %v533
          %v535 = vlaneseq
          %v536 = vand.u32 %v535, 127
          %vm537 = vcmp.eq.s32.totalorder %v536, 16
          %v538 = vsel %vm537, 1.0, %v532
          %v539 = vsel %vm537, 1.0, %v534
          %v540 = vpack.c.bf16 %v539, %v538
          %v542 = vunpack.c.l.b16 %v540
          %v543 = vunpack.c.h.b16 %v540
          %v544 = vpack.c.b16 %v542, %v542
          %v545 = vpack.c.b16 %v543, %v543
          %548 = vst [vmem:[%s259] sm:$0xf] %v544
          %549 = vst [vmem:[%s259 + $0x4] sm:$0xf] %v545
        $region56: #{tpu_custom_call.1} parent=35 // pred_fallthru
          _
        %s550 = sand.u32 %s133, 1
        %s551 = scalar_lea.sflag [#allocation5], %s550
        %s552 = sand.u32 %s133, 1
        %s553 = smul.addr %s552, 8
        %s554 = scalar_lea.vmem [#allocation9], %s553
        // Predicated region
        $region57: #{tpu_custom_call.1} parent=35 // pred_check
          %p555 = pneg %p143
        $region58: #{tpu_custom_call.1} parent=35 // pred_check_branch
          %557 = sbr.rel (%p555) target = $region60
        $region59: #{tpu_custom_call.1} parent=35 // pred_region
          %s558 = smul.u32 2, %s26
          %s560 = ssub.s32 128, 128
          %561 = vsyncadd %s551, %s560
          %s562 = smul.addr %s558, 64
          %s563 = scalar_lea.hbm %s4, %s562
          %s564 = sshll.u32 %s554, 4
          %s565 = int_to_ptr.vmem [resolvable:$true] %s564
          %570 = dma.vmem_to_hbm [thread:$0]  %s565, 128, %s563, %s551, 64, 64, 4
        $region60: #{tpu_custom_call.1} parent=35 // pred_fallthru
          _
      $region36: #{tpu_custom_call.1} parent=5 // pred_fallthru
        _
      %p571 = scmp.le.s32.totalorder 2, %s17
      // Predicated region
      $region61: #{tpu_custom_call.1} parent=5 // pred_check
        %p572 = pneg %p571
      $region62: #{tpu_custom_call.1} parent=5 // pred_check_branch
        %574 = sbr.rel (%p572) target = $region64
      $region63: #{tpu_custom_call.1} parent=5 // pred_region
        %s575 = ssub.s32 %s17, 2
        // Predicated region
        $region65: #{tpu_custom_call.1} parent=63 // pred_check
          %p576 = pneg %p149
        $region66: #{tpu_custom_call.1} parent=63 // pred_check_branch
          %578 = sbr.rel (%p576) target = $region68
        $region67: #{tpu_custom_call.1} parent=63 // pred_region
          %s579 = sand.u32 %s134, 1
          %s580 = scalar_lea.sflag [#allocation5], %s579
          %s581 = sand.u32 %s134, 1
          %s582 = smul.addr %s581, 8
          %s583 = scalar_lea.vmem [#allocation9], %s582
          %584 = dma.done %s580, 128
        $region68: #{tpu_custom_call.1} parent=63 // pred_fallthru
          _
      $region64: #{tpu_custom_call.1} parent=5 // pred_fallthru
        _
    $region6: #{tpu_custom_call.1} parent=1 // loop_footer
      %s21 = sadd.s32 1, %s17
    $region7: #{tpu_custom_call.1} parent=1 // loop_footer_branch
      %16 = sbr.rel target = $region3
    $region8: #{tpu_custom_call.1} parent=1 // loop_exit
      _
    %585 = vsyncpa [#allocation4], 1
    %s586 = scalar_lea.sflag [#allocation4], 1
    %587 = vsyncpa %s586, 1
    %588 = vsyncpa [#allocation7], 1
    %589 = vsyncpa [#allocation5], 1
    %s590 = scalar_lea.sflag [#allocation5], 1
    %591 = vsyncpa %s590, 1

</llo_original>
